<compile_context>
chip_gen: v7x
topology: tpu7x:2x2x1
jax: 0.10.0
libtpu: 0.0.40
codegen_flags: <defaults>
</compile_context>

<pallas_src>
import functools

import jax
import jax.numpy as jnp
from jax.experimental import pallas as pl
from jax.experimental.pallas import tpu as pltpu


def _round_up(n, m):
    return (n + m - 1) // m * m


def _cdiv(a, b):
    return (a + b - 1) // b


def actor_mlp_kernel(x_ref, w1_ref, b1_ref, w2_ref, b2_ref, w3_ref, b3_ref,
                     mu_ref):
    cdt = w1_ref.dtype  # matmul operand dtype (bf16 or f32); accumulation f32
    # Layer 1: [TB, S] @ [S, 128] + [1, 128] -> tanh   (f32 bias/activation)
    h1 = jnp.tanh(
        jnp.dot(x_ref[...].astype(cdt), w1_ref[...],
                preferred_element_type=jnp.float32) + b1_ref[...])
    # Layer 2: [TB, 128] @ [128, 128] + [1, 128] -> tanh
    h2 = jnp.tanh(
        jnp.dot(h1.astype(cdt), w2_ref[...],
                preferred_element_type=jnp.float32) + b2_ref[...])
    # Layer 3: [TB, 128] @ [128, A] + [1, A]  (narrow, un-padded output store)
    mu_ref[...] = (
        jnp.dot(h2.astype(cdt), w3_ref[...],
                preferred_element_type=jnp.float32)
        + b3_ref[...]).astype(mu_ref.dtype)


def init_actor_params(key, state_dim, action_dim):
    """Matches init_weights: W ~ N(0, 0.1), b = 0.1.

    Weights stored as [in, out] (transpose of PyTorch's [out, in])."""
    k1, k2, k3 = jax.random.split(key, 3)
    w1 = 0.1 * jax.random.normal(k1, (state_dim, 100), jnp.float32)
    b1 = jnp.full((1, 100), 0.1, jnp.float32)
    w2 = 0.1 * jax.random.normal(k2, (100, 50), jnp.float32)
    b2 = jnp.full((1, 50), 0.1, jnp.float32)
    w3 = 0.1 * jax.random.normal(k3, (50, action_dim), jnp.float32)
    b3 = jnp.full((1, action_dim), 0.1, jnp.float32)
    return (w1, b1, w2, b2, w3, b3)


def pad_actor_params(params, compute_dtype=jnp.bfloat16):
    """Zero-pad HIDDEN dims to 128 (done once); keep action_dim un-padded.

    Exactness of the padding is preserved: padded hidden units have zero
    weight AND zero bias, so tanh(0)=0 contributes nothing.  Weights are cast
    to `compute_dtype` (MXU operand dtype); biases stay f32."""
    w1, b1, w2, b2, w3, b3 = params
    s, h1 = w1.shape
    h2 = w2.shape[1]
    h1p, h2p = _round_up(h1, 128), _round_up(h2, 128)

    def pad2(m, rows, cols):
        return jnp.pad(m, ((0, rows - m.shape[0]), (0, cols - m.shape[1])))

    return (pad2(w1, s, h1p).astype(compute_dtype),
            pad2(b1, 1, h1p).astype(jnp.float32),
            pad2(w2, h1p, h2p).astype(compute_dtype),
            pad2(b2, 1, h2p).astype(jnp.float32),
            pad2(w3, h2p, w3.shape[1]).astype(compute_dtype),
            b3.astype(jnp.float32))


@functools.partial(jax.jit, static_argnames=("action_dim", "block_batch"))
def deterministic_actor_forward(x, padded_params, sigma, *, action_dim,
                                block_batch=1024):
    """Pallas-backed forward. Returns (mu, (mu, sigma)) mirroring (mu, dist)."""
    w1, b1, w2, b2, w3, b3 = padded_params
    batch, state_dim = x.shape
    h1p = w1.shape[1]
    h2p = w2.shape[1]
    assert w3.shape[1] == action_dim

    # Balanced batch tiling: derive the tile from the number of tiles so the
    # padding waste stays small at any batch size.  Force >= 2 grid steps when
    # the batch allows it so the "parallel" axis can shard across v7x's two
    # TensorCores.
    n_tiles = _cdiv(batch, block_batch)
    if batch >= 16:
        n_tiles = max(n_tiles, 2)
    tb = _round_up(_cdiv(batch, n_tiles), 8)
    n_tiles = _cdiv(batch, tb)
    padded_b = n_tiles * tb
    if padded_b != batch:
        x = jnp.pad(x, ((0, padded_b - batch), (0, 0)))
    grid = (n_tiles,)

    # Advisory cost hint for the XLA scheduler.
    flops = 2 * padded_b * (state_dim * h1p + h1p * h2p + h2p * action_dim)
    transcendentals = padded_b * (h1p + h2p)
    bytes_accessed = (x.dtype.itemsize * padded_b * state_dim
                      + 4 * padded_b * action_dim
                      + sum(int(a.size) * a.dtype.itemsize
                            for a in (w1, b1, w2, b2, w3, b3)))

    # Weights/biases: constant block index -> resident in VMEM across the grid
    # (no re-DMA).  Total footprint < 0.2 MB even double-buffered.
    def resident(arr):
        return pl.BlockSpec(arr.shape, lambda i: (0, 0))

    mu_padded = pl.pallas_call(
        actor_mlp_kernel,
        out_shape=jax.ShapeDtypeStruct((padded_b, action_dim), jnp.float32),
        grid=grid,
        in_specs=[
            pl.BlockSpec((tb, state_dim), lambda i: (i, 0)),
            resident(w1), resident(b1),
            resident(w2), resident(b2),
            resident(w3), resident(b3),
        ],
        out_specs=pl.BlockSpec((tb, action_dim), lambda i: (i, 0)),
        compiler_params=pltpu.CompilerParams(
            dimension_semantics=("parallel",)),
        cost_estimate=pl.CostEstimate(
            flops=flops,
            transcendentals=transcendentals,
            bytes_accessed=bytes_accessed),
    )(x, w1, b1, w2, b2, w3, b3)

    mu = mu_padded[:batch]
    # "dist" = Normal(mu, sigma): represented by its parameters.  sigma is kept
    # as a scalar (broadcast lazily by any consumer) -- no extra fill kernel.
    sigma_param = jnp.asarray(sigma, dtype=mu.dtype)
    return mu, (mu, sigma_param)


if __name__ == "__main__":
    state_dim = 32
    action_dim = 8
    batch = 8
    max_action = 1.0  # stored-but-unused in forward; kept for parity
    sigma = 0.2

    key = jax.random.PRNGKey(0)
    pkey, xkey = jax.random.split(key)
    params = init_actor_params(pkey, state_dim, action_dim)
    x = jax.random.normal(xkey, (batch, state_dim), jnp.float32)

    # Pure-JAX f32 reference.
    w1, b1, w2, b2, w3, b3 = params
    h1 = jnp.tanh(x @ w1 + b1)
    h2 = jnp.tanh(h1 @ w2 + b2)
    mu_ref = h2 @ w3 + b3

    # f32 parameter path: exact match vs the reference.
    params_f32 = pad_actor_params(params, compute_dtype=jnp.float32)
    mu32, (dmu32, dsig32) = deterministic_actor_forward(
        x, params_f32, sigma, action_dim=action_dim)
    jax.block_until_ready(mu32)
    assert mu32.shape == (batch, action_dim)
    assert jnp.allclose(mu32, mu_ref, atol=1e-5, rtol=1e-5), "f32 mismatch"
    assert jnp.allclose(dmu32, mu32)
    assert abs(float(dsig32) - sigma) < 1e-6

    # bf16-matmul path (default deployment dtype): looser tolerance.
    params_bf16 = pad_actor_params(params, compute_dtype=jnp.bfloat16)
    mu16, (dmu16, dsig16) = deterministic_actor_forward(
        x, params_bf16, sigma, action_dim=action_dim)
    jax.block_until_ready(mu16)
    assert mu16.shape == (batch, action_dim)
    assert jnp.allclose(mu16, mu_ref, atol=5e-2, rtol=5e-2), "bf16 mismatch"
    assert jnp.allclose(dmu16, mu16)
    assert abs(float(dsig16) - sigma) < 1e-6

    print("KERNEL_OK")
</pallas_src>

<mosaic_0001>
module attributes {stable_mosaic.version = 11 : i64} {
  func.func @actor_mlp_kernel(%arg0: i32, %arg1: memref<8x32xf32, #tpu.memory_space<vmem>>, %arg2: memref<32x128xf32, #tpu.memory_space<vmem>>, %arg3: memref<1x128xf32, #tpu.memory_space<vmem>>, %arg4: memref<128x128xf32, #tpu.memory_space<vmem>>, %arg5: memref<1x128xf32, #tpu.memory_space<vmem>>, %arg6: memref<128x8xf32, #tpu.memory_space<vmem>>, %arg7: memref<1x8xf32, #tpu.memory_space<vmem>>, %arg8: memref<8x8xf32, #tpu.memory_space<vmem>>) attributes {dimension_semantics = [#tpu.dimension_semantics<parallel>], iteration_bounds = array<i64: 1>, scalar_prefetch = 0 : i64, scratch_operands = 0 : i64, tpu.core_type = #tpu.core_type<tc>, window_params = [{transform_indices = @transform_0, window_bounds = array<i64: 8, 32>}, {pipeline_mode = #tpu.pipeline_mode<synchronous>, transform_indices = @transform_1, window_bounds = array<i64: 32, 128>}, {pipeline_mode = #tpu.pipeline_mode<synchronous>, transform_indices = @transform_2, window_bounds = array<i64: 1, 128>}, {pipeline_mode = #tpu.pipeline_mode<synchronous>, transform_indices = @transform_3, window_bounds = array<i64: 128, 128>}, {pipeline_mode = #tpu.pipeline_mode<synchronous>, transform_indices = @transform_4, window_bounds = array<i64: 1, 128>}, {pipeline_mode = #tpu.pipeline_mode<synchronous>, transform_indices = @transform_5, window_bounds = array<i64: 128, 8>}, {pipeline_mode = #tpu.pipeline_mode<synchronous>, transform_indices = @transform_6, window_bounds = array<i64: 1, 8>}, {transform_indices = @transform_7, window_bounds = array<i64: 8, 8>}]} {
    %c0 = arith.constant 0 : index
    %c0_0 = arith.constant 0 : index
    %0 = vector.load %arg1[%c0, %c0_0] : memref<8x32xf32, #tpu.memory_space<vmem>>, vector<8x32xf32>
    %c0_1 = arith.constant 0 : index
    %c0_2 = arith.constant 0 : index
    %1 = vector.load %arg2[%c0_1, %c0_2] : memref<32x128xf32, #tpu.memory_space<vmem>>, vector<32x128xf32>
    %cst = arith.constant dense<0.000000e+00> : vector<8x128xf32>
    %2 = tpu.matmul %0, %1, %cst {dimension_numbers = #tpu.dot_dimension_numbers<[1], [0], [0], [1], [0, 0, 1, 1], [], []>} : vector<8x32xf32>, vector<32x128xf32>, vector<8x128xf32> -> vector<8x128xf32>
    %c0_3 = arith.constant 0 : index
    %c0_4 = arith.constant 0 : index
    %3 = vector.load %arg3[%c0_3, %c0_4] : memref<1x128xf32, #tpu.memory_space<vmem>>, vector<1x128xf32>
    %4 = vector.broadcast %3 : vector<1x128xf32> to vector<8x128xf32>
    %5 = arith.addf %2, %4 : vector<8x128xf32>
    %6 = math.tanh %5 : vector<8x128xf32>
    %c0_5 = arith.constant 0 : index
    %c0_6 = arith.constant 0 : index
    %7 = vector.load %arg4[%c0_5, %c0_6] : memref<128x128xf32, #tpu.memory_space<vmem>>, vector<128x128xf32>
    %cst_7 = arith.constant dense<0.000000e+00> : vector<8x128xf32>
    %8 = tpu.matmul %6, %7, %cst_7 {dimension_numbers = #tpu.dot_dimension_numbers<[1], [0], [0], [1], [0, 0, 1, 1], [], []>} : vector<8x128xf32>, vector<128x128xf32>, vector<8x128xf32> -> vector<8x128xf32>
    %c0_8 = arith.constant 0 : index
    %c0_9 = arith.constant 0 : index
    %9 = vector.load %arg5[%c0_8, %c0_9] : memref<1x128xf32, #tpu.memory_space<vmem>>, vector<1x128xf32>
    %10 = vector.broadcast %9 : vector<1x128xf32> to vector<8x128xf32>
    %11 = arith.addf %8, %10 : vector<8x128xf32>
    %12 = math.tanh %11 : vector<8x128xf32>
    %c0_10 = arith.constant 0 : index
    %c0_11 = arith.constant 0 : index
    %13 = vector.load %arg6[%c0_10, %c0_11] : memref<128x8xf32, #tpu.memory_space<vmem>>, vector<128x8xf32>
    %cst_12 = arith.constant dense<0.000000e+00> : vector<8x8xf32>
    %14 = tpu.matmul %12, %13, %cst_12 {dimension_numbers = #tpu.dot_dimension_numbers<[1], [0], [0], [1], [0, 0, 1, 1], [], []>} : vector<8x128xf32>, vector<128x8xf32>, vector<8x8xf32> -> vector<8x8xf32>
    %c0_13 = arith.constant 0 : index
    %c0_14 = arith.constant 0 : index
    %15 = vector.load %arg7[%c0_13, %c0_14] : memref<1x8xf32, #tpu.memory_space<vmem>>, vector<1x8xf32>
    %16 = vector.broadcast %15 : vector<1x8xf32> to vector<8x8xf32>
    %17 = arith.addf %14, %16 : vector<8x8xf32>
    %c0_15 = arith.constant 0 : index
    %c0_16 = arith.constant 0 : index
    %18 = vector.load %arg8[%c0_15, %c0_16] : memref<8x8xf32, #tpu.memory_space<vmem>>, vector<8x8xf32>
    tpu.vector_store %arg8[%c0_15, %c0_16], %17 {strides = array<i32>} : memref<8x8xf32, #tpu.memory_space<vmem>>, vector<8x8xf32>,
    return
  }
  func.func @transform_0(%arg0: i32) -> (i32, i32) {
    %c0_i32 = arith.constant 0 : i32
    %c0_i32_0 = arith.constant 0 : i32
    return %arg0, %c0_i32 : i32, i32
  }
  func.func @transform_1(%arg0: i32) -> (i32, i32) {
    %c0_i32 = arith.constant 0 : i32
    %c0_i32_0 = arith.constant 0 : i32
    %c0_i32_1 = arith.constant 0 : i32
    return %c0_i32, %c0_i32_0 : i32, i32
  }
  func.func @transform_2(%arg0: i32) -> (i32, i32) {
    %c0_i32 = arith.constant 0 : i32
    %c0_i32_0 = arith.constant 0 : i32
    %c0_i32_1 = arith.constant 0 : i32
    return %c0_i32, %c0_i32_0 : i32, i32
  }
  func.func @transform_3(%arg0: i32) -> (i32, i32) {
    %c0_i32 = arith.constant 0 : i32
    %c0_i32_0 = arith.constant 0 : i32
    %c0_i32_1 = arith.constant 0 : i32
    return %c0_i32, %c0_i32_0 : i32, i32
  }
  func.func @transform_4(%arg0: i32) -> (i32, i32) {
    %c0_i32 = arith.constant 0 : i32
    %c0_i32_0 = arith.constant 0 : i32
    %c0_i32_1 = arith.constant 0 : i32
    return %c0_i32, %c0_i32_0 : i32, i32
  }
  func.func @transform_5(%arg0: i32) -> (i32, i32) {
    %c0_i32 = arith.constant 0 : i32
    %c0_i32_0 = arith.constant 0 : i32
    %c0_i32_1 = arith.constant 0 : i32
    return %c0_i32, %c0_i32_0 : i32, i32
  }
  func.func @transform_6(%arg0: i32) -> (i32, i32) {
    %c0_i32 = arith.constant 0 : i32
    %c0_i32_0 = arith.constant 0 : i32
    %c0_i32_1 = arith.constant 0 : i32
    return %c0_i32, %c0_i32_0 : i32, i32
  }
  func.func @transform_7(%arg0: i32) -> (i32, i32) {
    %c0_i32 = arith.constant 0 : i32
    %c0_i32_0 = arith.constant 0 : i32
    return %arg0, %c0_i32 : i32, i32
  }
}

</mosaic_0001>

<llo_original>
// kernel: deterministic_actor_forward.1
$region0: #{deterministic_actor_forward.1}
  #allocation0 [shape = 'u32[]', space=smem, size = 0x4, offset = 0x4, fixed_abs, tag = 'smem constant byte address 0x4 - core index']
  #allocation1 [shape = 'u32[144,128]{1,0:T(1,128)}', space=vmem, size = 0x12000, scoped, tag = 'internal scratch']
  %s0 = inlined_call_operand.vmem [shape: f32[8,32], index: 0, kind: input, shape index: {}]
  %s1 = inlined_call_operand.hbm [shape: f32[32,128], index: 1, kind: input, shape index: {}]
  %s2 = inlined_call_operand.vmem [shape: f32[1,128], index: 2, kind: input, shape index: {}]
  %s3 = inlined_call_operand.vmem [shape: f32[128,128], index: 3, kind: input, shape index: {}]
  %s4 = inlined_call_operand.vmem [shape: f32[1,128], index: 4, kind: input, shape index: {}]
  %s5 = inlined_call_operand.vmem [shape: f32[128,8], index: 5, kind: input, shape index: {}]
  %s6 = inlined_call_operand.vmem [shape: f32[1,8], index: 6, kind: input, shape index: {}]
  %s7 = inlined_call_operand.vmem [shape: f32[8,8], index: 7, kind: output, shape index: {}]
  %s8 = sld [smem:[#allocation0]]
  $region42: #{deterministic_actor_forward.1} parent=0
    _
  %s10 = ssub.s32 1, %s8
  %s11 = scalar_select 0, %s10, %s8
  $region1: #{deterministic_actor_forward.1} parent=0
    #allocation2 [shape = 'u8[16384]{0}', space=vmem, size = 0x4000, scoped, tag = 'input window, operand 1, single buffered']
    #allocation3 [shape = 's32[1]{0}', space=sflag, size = 0x4, scoped, tag = 'scoped memory for deterministic_actor_forward.1']
    %12 = vsyncpa [#allocation3], 0
    // Predicated region
    $region2: #{deterministic_actor_forward.1} parent=1 // pred_check
      _
    $region3: #{deterministic_actor_forward.1} parent=1 // pred_check_branch
      %14 = sbr.rel (0) target = $region5
    $region4: #{deterministic_actor_forward.1} parent=1 // pred_region
      _
    $region5: #{deterministic_actor_forward.1} parent=1 // pred_fallthru
      _
    // Predicated region
    $region6: #{deterministic_actor_forward.1} parent=1 // pred_check
      _
    $region7: #{deterministic_actor_forward.1} parent=1 // pred_check_branch
      %16 = sbr.rel (0) target = $region9
    $region8: #{deterministic_actor_forward.1} parent=1 // pred_region
      %s18 = ssub.s32 512, 512
      %19 = vsyncadd [#allocation3], %s18
      %s20 = sshll.u32 [#allocation2], 4
      %s21 = int_to_ptr.vmem [resolvable:$true] %s20
      %26 = dma.hbm_to_vmem [thread:$0]  %s1, 512, %s21, [#allocation3], 128, 128, 8
    $region9: #{deterministic_actor_forward.1} parent=1 // pred_fallthru
      _
    // Predicated region
    $region10: #{deterministic_actor_forward.1} parent=1 // pred_check
      _
    $region11: #{deterministic_actor_forward.1} parent=1 // pred_check_branch
      %28 = sbr.rel (0) target = $region13
    $region12: #{deterministic_actor_forward.1} parent=1 // pred_region
      _
    $region13: #{deterministic_actor_forward.1} parent=1 // pred_fallthru
      _
    // Predicated region
    $region14: #{deterministic_actor_forward.1} parent=1 // pred_check
      _
    $region15: #{deterministic_actor_forward.1} parent=1 // pred_check_branch
      %30 = sbr.rel (0) target = $region17
    $region16: #{deterministic_actor_forward.1} parent=1 // pred_region
      _
    $region17: #{deterministic_actor_forward.1} parent=1 // pred_fallthru
      _
    // Predicated region
    $region18: #{deterministic_actor_forward.1} parent=1 // pred_check
      _
    $region19: #{deterministic_actor_forward.1} parent=1 // pred_check_branch
      %32 = sbr.rel (0) target = $region21
    $region20: #{deterministic_actor_forward.1} parent=1 // pred_region
      _
    $region21: #{deterministic_actor_forward.1} parent=1 // pred_fallthru
      _
    // Predicated region
    $region22: #{deterministic_actor_forward.1} parent=1 // pred_check
      _
    $region23: #{deterministic_actor_forward.1} parent=1 // pred_check_branch
      %34 = sbr.rel (0) target = $region25
    $region24: #{deterministic_actor_forward.1} parent=1 // pred_region
      _
    $region25: #{deterministic_actor_forward.1} parent=1 // pred_fallthru
      _
    // Predicated region
    $region26: #{deterministic_actor_forward.1} parent=1 // pred_check
      _
    $region27: #{deterministic_actor_forward.1} parent=1 // pred_check_branch
      %36 = sbr.rel (0) target = $region29
    $region28: #{deterministic_actor_forward.1} parent=1 // pred_region
      _
    $region29: #{deterministic_actor_forward.1} parent=1 // pred_fallthru
      _
    // Predicated region
    $region30: #{deterministic_actor_forward.1} parent=1 // pred_check
      _
    $region31: #{deterministic_actor_forward.1} parent=1 // pred_check_branch
      %38 = sbr.rel (0) target = $region33
    $region32: #{deterministic_actor_forward.1} parent=1 // pred_region
      %39 = dma.done [#allocation3], 512
    $region33: #{deterministic_actor_forward.1} parent=1 // pred_fallthru
      _
    %v40 = vld [vmem:[%s0] sm:$0xff]
    %v41 = vld [vmem:[#allocation2] sm:$0xff]
    %v42 = vld [vmem:[#allocation2 + $0x8] sm:$0xff]
    %v43 = vld [vmem:[#allocation2 + $0x10] sm:$0xff]
    %v44 = vld [vmem:[#allocation2 + $0x18] sm:$0xff]
    %v45 = vld [vmem:[%s2] sm:$0x1]
    %v47 = vlaneseq
    %v48 = vshrl.u32 %v47, 7
    %v49 = vsub.s32 0, %v48
    %v50 = vrot.slane %v45, %v49
    %vm52 = vcmask 261120
    %v54 = vsel %vm52, %v40, 0
    %56 = vmatprep.subr.mxu0 0.0
    %57 = vmatpush1.msra.mxu0 %v41
    %58 = vmatprep.subr.mxu0 0.0
    %59 = vmatpush1.msra.mxu0 %v42
    %60 = vmatprep.subr.mxu0 0.0
    %61 = vmatpush1.msra.mxu0 %v43
    %62 = vmatprep.subr.mxu0 0.0
    %63 = vmatpush1.msra.mxu0 %v44
    %64 = vmatprep.subr.mxu0 0.0
    %65 = vmatpush1.msra.mxu0 0.0
    %66 = vmatprep.subr.mxu0 0.0
    %67 = vmatpush1.msra.mxu0 0.0
    %68 = vmatprep.subr.mxu0 0.0
    %69 = vmatpush1.msra.mxu0 0.0
    %70 = vmatprep.subr.mxu0 0.0
    %71 = vmatpush1.msra.mxu0 0.0
    %72 = vmatprep.subr.mxu0 0.0
    %73 = vmatpush1.msra.mxu0 0.0
    %74 = vmatprep.subr.mxu0 0.0
    %75 = vmatpush1.msra.mxu0 0.0
    %76 = vmatprep.subr.mxu0 0.0
    %77 = vmatpush1.msra.mxu0 0.0
    %78 = vmatprep.subr.mxu0 0.0
    %79 = vmatpush1.msra.mxu0 0.0
    %80 = vmatprep.subr.mxu0 0.0
    %81 = vmatpush1.msra.mxu0 0.0
    %82 = vmatprep.subr.mxu0 0.0
    %83 = vmatpush1.msra.mxu0 0.0
    %84 = vmatprep.subr.mxu0 0.0
    %85 = vmatpush1.msra.mxu0 0.0
    %86 = vmatprep.subr.mxu0 0.0
    %87 = vmatpush1.msra.mxu0 0.0
    %88 = vmatprep.subr.mxu0 0.0
    %89 = vmatpush1.msra.mxu0 0.0
    %90 = vmatprep.subr.mxu0 0.0
    %91 = vmatpush1.msra.mxu0 0.0
    %92 = vmatprep.subr.mxu0 0.0
    %93 = vmatpush1.msra.mxu0 0.0
    %94 = vmatprep.subr.mxu0 0.0
    %95 = vmatpush1.msra.mxu0 0.0
    %96 = vmatprep.subr.mxu0 0.0
    %97 = vmatpush1.msra.mxu0 0.0
    %98 = vmatprep.subr.mxu0 0.0
    %99 = vmatpush1.msra.mxu0 0.0
    %100 = vmatprep.subr.mxu0 0.0
    %101 = vmatpush1.msra.mxu0 0.0
    %102 = vmatprep.subr.mxu0 0.0
    %103 = vmatpush1.msra.mxu0 0.0
    %104 = vmatprep.subr.mxu0 0.0
    %105 = vmatpush1.msra.mxu0 0.0
    %106 = vmatprep.subr.mxu0 0.0
    %107 = vmatpush1.msra.mxu0 0.0
    %108 = vmatprep.subr.mxu0 0.0
    %109 = vmatpush1.msra.mxu0 0.0
    %110 = vmatprep.subr.mxu0 0.0
    %111 = vmatpush1.msra.mxu0 0.0
    %112 = vmatprep.subr.mxu0 0.0
    %113 = vmatpush1.msra.mxu0 0.0
    %114 = vmatprep.subr.mxu0 0.0
    %115 = vmatpush1.msra.mxu0 0.0
    %116 = vmatprep.subr.mxu0 0.0
    %117 = vmatpush1.msra.mxu0 0.0
    %118 = vmatprep.subr.mxu0 0.0
    %119 = vmatpush1.msra.mxu0 0.0
    %120 = vmatprep.mubr.f32.mxu0 0.0
    %121 = vmatmul.mubr.f32.gmra.mrb[0].mxu0 %v54
    %v122 = vpop.f32.mrb[0].mxu0
    %v123 = vadd.f32 %v50, %v122
    %v124 = vpop.f32.mrb[0].mxu0
    %125 = vdwg.mxu0
    %v126 = vtanh.pop %v123
    %v127 = vld [vmem:[%s3] sm:$0xff]
    %v128 = vld [vmem:[%s3 + $0x8] sm:$0xff]
    %v129 = vld [vmem:[%s3 + $0x10] sm:$0xff]
    %v130 = vld [vmem:[%s3 + $0x18] sm:$0xff]
    %v131 = vld [vmem:[%s3 + $0x20] sm:$0xff]
    %v132 = vld [vmem:[%s3 + $0x28] sm:$0xff]
    %v133 = vld [vmem:[%s3 + $0x30] sm:$0xff]
    %v134 = vld [vmem:[%s3 + $0x38] sm:$0xff]
    %v135 = vld [vmem:[%s3 + $0x40] sm:$0xff]
    %v136 = vld [vmem:[%s3 + $0x48] sm:$0xff]
    %v137 = vld [vmem:[%s3 + $0x50] sm:$0xff]
    %v138 = vld [vmem:[%s3 + $0x58] sm:$0xff]
    %v139 = vld [vmem:[%s3 + $0x60] sm:$0xff]
    %v140 = vld [vmem:[%s3 + $0x68] sm:$0xff]
    %v141 = vld [vmem:[%s3 + $0x70] sm:$0xff]
    %v142 = vld [vmem:[%s3 + $0x78] sm:$0xff]
    %v143 = vld [vmem:[%s4] sm:$0x1]
    %v145 = vlaneseq
    %v146 = vshrl.u32 %v145, 7
    %v147 = vsub.s32 0, %v146
    %v148 = vrot.slane %v143, %v147
    %150 = vmatprep.subr.mxu0 0.0
    %151 = vmatpush1.msra.mxu0 %v127
    %152 = vmatprep.subr.mxu0 0.0
    %153 = vmatpush1.msra.mxu0 %v128
    %154 = vmatprep.subr.mxu0 0.0
    %155 = vmatpush1.msra.mxu0 %v129
    %156 = vmatprep.subr.mxu0 0.0
    %157 = vmatpush1.msra.mxu0 %v130
    %158 = vmatprep.subr.mxu0 0.0
    %159 = vmatpush1.msra.mxu0 %v131
    %160 = vmatprep.subr.mxu0 0.0
    %161 = vmatpush1.msra.mxu0 %v132
    %162 = vmatprep.subr.mxu0 0.0
    %163 = vmatpush1.msra.mxu0 %v133
    %164 = vmatprep.subr.mxu0 0.0
    %165 = vmatpush1.msra.mxu0 %v134
    %166 = vmatprep.subr.mxu0 0.0
    %167 = vmatpush1.msra.mxu0 %v135
    %168 = vmatprep.subr.mxu0 0.0
    %169 = vmatpush1.msra.mxu0 %v136
    %170 = vmatprep.subr.mxu0 0.0
    %171 = vmatpush1.msra.mxu0 %v137
    %172 = vmatprep.subr.mxu0 0.0
    %173 = vmatpush1.msra.mxu0 %v138
    %174 = vmatprep.subr.mxu0 0.0
    %175 = vmatpush1.msra.mxu0 %v139
    %176 = vmatprep.subr.mxu0 0.0
    %177 = vmatpush1.msra.mxu0 %v140
    %178 = vmatprep.subr.mxu0 0.0
    %179 = vmatpush1.msra.mxu0 %v141
    %180 = vmatprep.subr.mxu0 0.0
    %181 = vmatpush1.msra.mxu0 %v142
    %182 = vmatprep.subr.mxu0 0.0
    %183 = vmatpush1.msra.mxu0 0.0
    %184 = vmatprep.subr.mxu0 0.0
    %185 = vmatpush1.msra.mxu0 0.0
    %186 = vmatprep.subr.mxu0 0.0
    %187 = vmatpush1.msra.mxu0 0.0
    %188 = vmatprep.subr.mxu0 0.0
    %189 = vmatpush1.msra.mxu0 0.0
    %190 = vmatprep.subr.mxu0 0.0
    %191 = vmatpush1.msra.mxu0 0.0
    %192 = vmatprep.subr.mxu0 0.0
    %193 = vmatpush1.msra.mxu0 0.0
    %194 = vmatprep.subr.mxu0 0.0
    %195 = vmatpush1.msra.mxu0 0.0
    %196 = vmatprep.subr.mxu0 0.0
    %197 = vmatpush1.msra.mxu0 0.0
    %198 = vmatprep.subr.mxu0 0.0
    %199 = vmatpush1.msra.mxu0 0.0
    %200 = vmatprep.subr.mxu0 0.0
    %201 = vmatpush1.msra.mxu0 0.0
    %202 = vmatprep.subr.mxu0 0.0
    %203 = vmatpush1.msra.mxu0 0.0
    %204 = vmatprep.subr.mxu0 0.0
    %205 = vmatpush1.msra.mxu0 0.0
    %206 = vmatprep.subr.mxu0 0.0
    %207 = vmatpush1.msra.mxu0 0.0
    %208 = vmatprep.subr.mxu0 0.0
    %209 = vmatpush1.msra.mxu0 0.0
    %210 = vmatprep.subr.mxu0 0.0
    %211 = vmatpush1.msra.mxu0 0.0
    %212 = vmatprep.subr.mxu0 0.0
    %213 = vmatpush1.msra.mxu0 0.0
    %214 = vmatprep.mubr.f32.mxu0 0.0
    %215 = vmatmul.mubr.f32.gmra.mrb[0].mxu0 %v126
    %v216 = vpop.f32.mrb[0].mxu0
    %v217 = vadd.f32 %v148, %v216
    %v218 = vpop.f32.mrb[0].mxu0
    %219 = vdwg.mxu0
    %v220 = vtanh.pop %v217
    %v221 = vld [vmem:[%s5] sm:$0xff]
    %v222 = vld [vmem:[%s5 + $0x8] sm:$0xff]
    %v223 = vld [vmem:[%s5 + $0x10] sm:$0xff]
    %v224 = vld [vmem:[%s5 + $0x18] sm:$0xff]
    %v225 = vld [vmem:[%s5 + $0x20] sm:$0xff]
    %v226 = vld [vmem:[%s5 + $0x28] sm:$0xff]
    %v227 = vld [vmem:[%s5 + $0x30] sm:$0xff]
    %v228 = vld [vmem:[%s5 + $0x38] sm:$0xff]
    %v229 = vld [vmem:[%s5 + $0x40] sm:$0xff]
    %v230 = vld [vmem:[%s5 + $0x48] sm:$0xff]
    %v231 = vld [vmem:[%s5 + $0x50] sm:$0xff]
    %v232 = vld [vmem:[%s5 + $0x58] sm:$0xff]
    %v233 = vld [vmem:[%s5 + $0x60] sm:$0xff]
    %v234 = vld [vmem:[%s5 + $0x68] sm:$0xff]
    %v235 = vld [vmem:[%s5 + $0x70] sm:$0xff]
    %v236 = vld [vmem:[%s5 + $0x78] sm:$0xff]
    %v237 = vld [vmem:[%s6] sm:$0x1]
    %v239 = vlaneseq
    %v240 = vshrl.u32 %v239, 7
    %v241 = vsub.s32 0, %v240
    %v242 = vrot.slane %v237, %v241
    %244 = vmatprep.subr.mxu0 0.0
    %245 = vmatpush1.msra.mxu0 %v221
    %246 = vmatprep.subr.mxu0 0.0
    %247 = vmatpush1.msra.mxu0 %v222
    %248 = vmatprep.subr.mxu0 0.0
    %249 = vmatpush1.msra.mxu0 %v223
    %250 = vmatprep.subr.mxu0 0.0
    %251 = vmatpush1.msra.mxu0 %v224
    %252 = vmatprep.subr.mxu0 0.0
    %253 = vmatpush1.msra.mxu0 %v225
    %254 = vmatprep.subr.mxu0 0.0
    %255 = vmatpush1.msra.mxu0 %v226
    %256 = vmatprep.subr.mxu0 0.0
    %257 = vmatpush1.msra.mxu0 %v227
    %258 = vmatprep.subr.mxu0 0.0
    %259 = vmatpush1.msra.mxu0 %v228
    %260 = vmatprep.subr.mxu0 0.0
    %261 = vmatpush1.msra.mxu0 %v229
    %262 = vmatprep.subr.mxu0 0.0
    %263 = vmatpush1.msra.mxu0 %v230
    %264 = vmatprep.subr.mxu0 0.0
    %265 = vmatpush1.msra.mxu0 %v231
    %266 = vmatprep.subr.mxu0 0.0
    %267 = vmatpush1.msra.mxu0 %v232
    %268 = vmatprep.subr.mxu0 0.0
    %269 = vmatpush1.msra.mxu0 %v233
    %270 = vmatprep.subr.mxu0 0.0
    %271 = vmatpush1.msra.mxu0 %v234
    %272 = vmatprep.subr.mxu0 0.0
    %273 = vmatpush1.msra.mxu0 %v235
    %274 = vmatprep.subr.mxu0 0.0
    %275 = vmatpush1.msra.mxu0 %v236
    %276 = vmatprep.subr.mxu0 0.0
    %277 = vmatpush1.msra.mxu0 0.0
    %278 = vmatprep.subr.mxu0 0.0
    %279 = vmatpush1.msra.mxu0 0.0
    %280 = vmatprep.subr.mxu0 0.0
    %281 = vmatpush1.msra.mxu0 0.0
    %282 = vmatprep.subr.mxu0 0.0
    %283 = vmatpush1.msra.mxu0 0.0
    %284 = vmatprep.subr.mxu0 0.0
    %285 = vmatpush1.msra.mxu0 0.0
    %286 = vmatprep.subr.mxu0 0.0
    %287 = vmatpush1.msra.mxu0 0.0
    %288 = vmatprep.subr.mxu0 0.0
    %289 = vmatpush1.msra.mxu0 0.0
    %290 = vmatprep.subr.mxu0 0.0
    %291 = vmatpush1.msra.mxu0 0.0
    %292 = vmatprep.subr.mxu0 0.0
    %293 = vmatpush1.msra.mxu0 0.0
    %294 = vmatprep.subr.mxu0 0.0
    %295 = vmatpush1.msra.mxu0 0.0
    %296 = vmatprep.subr.mxu0 0.0
    %297 = vmatpush1.msra.mxu0 0.0
    %298 = vmatprep.subr.mxu0 0.0
    %299 = vmatpush1.msra.mxu0 0.0
    %300 = vmatprep.subr.mxu0 0.0
    %301 = vmatpush1.msra.mxu0 0.0
    %302 = vmatprep.subr.mxu0 0.0
    %303 = vmatpush1.msra.mxu0 0.0
    %304 = vmatprep.subr.mxu0 0.0
    %305 = vmatpush1.msra.mxu0 0.0
    %306 = vmatprep.subr.mxu0 0.0
    %307 = vmatpush1.msra.mxu0 0.0
    %308 = vmatprep.mubr.f32.mxu0 0.0
    %309 = vmatmul.mubr.f32.gmra.mrb[0].mxu0 %v220
    %v310 = vpop.f32.mrb[0].mxu0
    %v311 = vadd.f32 %v242, %v310
    %v312 = vpop.f32.mrb[0].mxu0
    %313 = vdwg.mxu0
    %vm314 = vcmask 64512
    %315 = vst.msk [vmem:[%s7] sm:$0xff] %vm314, %v311
    // Predicated region
    $region34: #{deterministic_actor_forward.1} parent=1 // pred_check
      _
    $region35: #{deterministic_actor_forward.1} parent=1 // pred_check_branch
      %317 = sbr.rel (0) target = $region37
    $region36: #{deterministic_actor_forward.1} parent=1 // pred_region
      _
    $region37: #{deterministic_actor_forward.1} parent=1 // pred_fallthru
      _
    // Predicated region
    $region38: #{deterministic_actor_forward.1} parent=1 // pred_check
      _
    $region39: #{deterministic_actor_forward.1} parent=1 // pred_check_branch
      %319 = sbr.rel (0) target = $region41
    $region40: #{deterministic_actor_forward.1} parent=1 // pred_region
      _
    $region41: #{deterministic_actor_forward.1} parent=1 // pred_fallthru
      _
    %320 = vsyncpa [#allocation3], 1

</llo_original>
